<compile_context>
chip_gen: v7x
topology: tpu7x:2x2x1
jax: 0.10.0
libtpu: 0.0.40
codegen_flags: <defaults>
</compile_context>

<pallas_src>
import functools

import jax
import jax.numpy as jnp
import numpy as np
from jax.experimental import pallas as pl
from jax.experimental.pallas import tpu as pltpu


def _mask_branch_kernel(x_ref, cw_ref, cb_ref, fw_ref, fb_ref,
                        mask_ref, feat_ref, acc_ref, *, c_chunk):
    # x_ref   : (TB, C, THW)  NCHW slab: channels on sublanes, spatial on lanes
    # cw_ref  : (C, 1)        fused conv1x1 + BN2d weight
    # cb_ref  : (1, 1) SMEM   fused conv1x1 + BN2d bias (scalar)
    # fw_ref  : (C, D)        fused Linear + BN1d weight (transposed, 1/HW folded in)
    # fb_ref  : (1, D)        fused Linear + BN1d bias
    # mask_ref: (TB, THW)     sigmoid attention mask (lane-dense, input dtype)
    # feat_ref: (TB, D)       pooled + fc feature (written at last HW step)
    # acc_ref : (TB, C) f32   mask-weighted sum-pool accumulator (scratch)
    hw_i = pl.program_id(1)

    @pl.when(hw_i == 0)
    def _():
        acc_ref[...] = jnp.zeros_like(acc_ref)

    TB, C, THW = x_ref.shape

    # ---- Pass 1: 1x1 conv over channels (chunked), f32 accumulation. ----
    # Only one (TB, c_chunk, THW) f32 chunk is live at a time (vs. the whole
    # tile previously).  Chunks are static slices -> zero runtime cost, and
    # c_chunk is a multiple of 8 (or == C) so sublane tiles are not crossed.
    s = jnp.zeros((TB, THW), jnp.float32)
    for c0 in range(0, C, c_chunk):
        xc = x_ref[:, c0:c0 + c_chunk, :].astype(jnp.float32)      # (TB, cch, THW)
        wc = cw_ref[c0:c0 + c_chunk, :].astype(jnp.float32)        # (cch, 1)
        s = s + jnp.sum(xc * wc[None, :, :], axis=1)               # channel reduce
    s = s + cb_ref[0, 0]
    mask = jax.nn.sigmoid(s)                                       # (TB, THW) f32
    mask_ref[...] = mask.astype(mask_ref.dtype)

    # ---- Pass 2: mask-weighted sum-pool over this HW tile (chunked). ----
    # f32 products for numerical fidelity with the PyTorch f32 path (bf16
    # elementwise is an optional v6e/v7x micro-opt; kernel is HBM-bound anyway).
    for c0 in range(0, C, c_chunk):
        xc = x_ref[:, c0:c0 + c_chunk, :].astype(jnp.float32)      # (TB, cch, THW)
        acc_ref[:, c0:c0 + c_chunk] += jnp.sum(xc * mask[:, None, :], axis=2)

    # ---- Finalize: FC (Linear + folded BN1d; 1/HW folded into fw). ----
    @pl.when(hw_i == pl.num_programs(1) - 1)
    def _():
        feat = jnp.dot(acc_ref[...], fw_ref[...],
                       preferred_element_type=jnp.float32) + fb_ref[...]
        feat_ref[...] = feat.astype(feat_ref.dtype)


def _vmem_capacity_bytes():
    """Physical VMEM per TensorCore; conservative (v7x) fallback if unknown."""
    try:
        return int(pltpu.get_tpu_info().vmem_capacity_bytes)
    except Exception:
        return 64 * 1024 * 1024


def _pick_tiles(batch, chans, hw, d_out, x_isz, mask_isz, c_chunk, budget):
    """Pick (TB, THW) block sizes.

    Constraints: TB divides batch and (TB % 8 == 0 or TB == batch); THW divides
    hw and is a multiple of 128 (or equals hw).  Budget counts double-buffered
    input + outputs + in-kernel f32 temporaries.  Prefer >= 4 grid steps
    (>= 2 per v7x TensorCore), then >= 2; within that, maximize block size.
    """
    if hw % 128 == 0:
        thw_cands = [t for t in range(128, hw + 1, 128) if hw % t == 0]
    else:
        thw_cands = [hw]
    tb_cands = [d for d in range(1, batch + 1)
                if batch % d == 0 and (d % 8 == 0 or d == batch)]

    def footprint(tb, thw):
        x_blk = 2 * tb * chans * thw * x_isz               # double-buffered input
        mask_o = 2 * tb * thw * mask_isz                   # double-buffered mask out
        feat_o = 2 * tb * d_out * 4                        # double-buffered feat out
        acc = tb * chans * 4                               # pooled accumulator scratch
        temps = (2 * tb * thw + 2 * tb * c_chunk * thw) * 4  # s/mask + live f32 chunk
        wts = 2 * (chans + chans * d_out + d_out) * 4
        return x_blk + mask_o + feat_o + acc + temps + wts

    feas = [(tb, thw) for tb in tb_cands for thw in thw_cands
            if footprint(tb, thw) <= budget]
    if not feas:
        feas = [(min(tb_cands), min(thw_cands))]           # smallest possible block

    def steps(tb, thw):
        return (batch // tb) * (hw // thw)

    for min_steps in (4, 2, 1):
        cand = [c for c in feas if steps(*c) >= min_steps]
        if cand:
            return max(cand, key=lambda c: (c[0] * c[1], c[0]))
    return max(feas, key=lambda c: (c[0] * c[1], c[0]))


def mask_branch_forward(x_nchw, conv_w, conv_b, fc_w_t, fc_b, height, width,
                        mask_dtype=None):
    """x_nchw: (B, C, H, W).

    Returns (x_merge (B, D) f32, x_left (B, 1, H, W) in `mask_dtype`
    [default: x's dtype]).
    """
    B, C, H, W = x_nchw.shape
    assert (H, W) == (height, width), \
        "AvgPool2d((height,width)) expects H==height, W==width"
    HW = H * W
    D = fc_w_t.shape[1]
    mask_dtype = x_nchw.dtype if mask_dtype is None else jnp.dtype(mask_dtype)

    # Free reshape (no HBM transpose): NCHW -> (B, C, HW).
    x_chw = x_nchw.reshape(B, C, HW)

    # Parameter prep (tiny, XLA-side): fold the average-pool's 1/HW into the
    # FC weight so the kernel sum-pools.
    cw = jnp.asarray(conv_w, jnp.float32).reshape(C, 1)
    cb = jnp.asarray(conv_b, jnp.float32).reshape(1, 1)
    fw = jnp.asarray(fc_w_t, jnp.float32) * (1.0 / HW)
    fb = jnp.asarray(fc_b, jnp.float32).reshape(1, D)

    # Channel chunk size for the in-kernel loop (multiple of 8 when possible).
    c_chunk = next((d for d in (32, 16, 8) if C % d == 0), C)

    # Generation-aware VMEM budgeting (v5e/v6e: 128 MiB, v7x: 64 MiB per TC).
    vmem_cap = _vmem_capacity_bytes()
    budget = min(48 * 2**20, max(16 * 2**20, vmem_cap // 2 - 8 * 2**20))
    vmem_limit = min(vmem_cap * 3 // 4, budget + 24 * 2**20)

    TB, THW = _pick_tiles(B, C, HW, D, x_chw.dtype.itemsize,
                          mask_dtype.itemsize, c_chunk, budget)
    grid = (B // TB, HW // THW)

    kernel = functools.partial(_mask_branch_kernel, c_chunk=c_chunk)

    grid_spec = pltpu.PrefetchScalarGridSpec(
        num_scalar_prefetch=0,
        grid=grid,
        in_specs=[
            pl.BlockSpec((TB, C, THW), lambda b, h: (b, 0, h)),   # x slab
            pl.BlockSpec((C, 1), lambda b, h: (0, 0)),            # conv weight
            pl.BlockSpec(memory_space=pltpu.MemorySpace.SMEM),    # conv bias scalar
            pl.BlockSpec((C, D), lambda b, h: (0, 0)),            # fc weight (C, D)
            pl.BlockSpec((1, D), lambda b, h: (0, 0)),            # fc bias
        ],
        out_specs=[
            pl.BlockSpec((TB, THW), lambda b, h: (b, h)),         # mask, lane-dense
            pl.BlockSpec((TB, D), lambda b, h: (b, 0)),           # feature (revisited over h)
        ],
        scratch_shapes=[pltpu.VMEM((TB, C), jnp.float32)],        # pooled accumulator
    )

    mask_flat, feat = pl.pallas_call(
        kernel,
        grid_spec=grid_spec,
        out_shape=(
            jax.ShapeDtypeStruct((B, HW), mask_dtype),
            jax.ShapeDtypeStruct((B, D), jnp.float32),
        ),
        compiler_params=pltpu.CompilerParams(
            dimension_semantics=("parallel", "arbitrary"),
            vmem_limit_bytes=vmem_limit,
        ),
    )(x_chw, cw, cb, fw, fb)

    x_left = mask_flat.reshape(B, 1, H, W)   # free reshape, matches PyTorch (B,1,H,W)
    x_merge = feat
    return x_merge, x_left


def _reference(x_nchw, conv_w, conv_b, fc_w_t, fc_b):
    # Pure-JAX f32 reference of the same math (PyTorch eval-mode semantics).
    B, C, H, W = x_nchw.shape
    x = x_nchw.astype(jnp.float32).reshape(B, C, H * W)
    s = jnp.sum(x * conv_w.reshape(1, C, 1), axis=1) + conv_b.reshape(1, 1)   # (B, HW)
    mask = jax.nn.sigmoid(s)
    pooled = jnp.mean(x * mask[:, None, :], axis=2)                           # (B, C)
    feat = pooled @ fc_w_t + fc_b                                             # (B, D)
    x_left = mask.reshape(B, 1, H, W)
    return feat, x_left


if __name__ == "__main__":
    # Small shapes consistent with the module's forward.
    B, C = 16, 16           # batch, in_planes
    H, W = 16, 8            # height, width (pool window == full spatial extent), HW = 128
    D = 32                  # branch_dim

    key = jax.random.PRNGKey(0)
    kx, kcw, kfw, kfb = jax.random.split(key, 4)

    # Activations in bf16 (halves the dominant HBM read); math is f32 in-kernel.
    x = jax.random.normal(kx, (B, C, H, W), jnp.float32).astype(jnp.bfloat16)

    eps = 1e-5
    # Conv1x1 (bias=False) + BatchNorm2d(1) in eval mode, folded.
    conv_w_raw = jax.random.normal(kcw, (C, 1), jnp.float32) * 0.1
    bn2_gamma, bn2_beta = jnp.ones((1,)), jnp.zeros((1,))
    bn2_mean, bn2_var = jnp.zeros((1,)), jnp.ones((1,))
    bn2_scale = bn2_gamma / jnp.sqrt(bn2_var + eps)
    conv_w = conv_w_raw * bn2_scale                                  # (C, 1)
    conv_b = (bn2_beta - bn2_mean * bn2_scale).reshape(1, 1)         # (1, 1)

    # Linear(C, D) + BatchNorm1d(D) in eval mode, folded.  Dropout p=0 -> no-op.
    fc_w_raw = jax.random.normal(kfw, (D, C), jnp.float32) * 0.1     # PyTorch Linear weight (D, C)
    fc_b_raw = jax.random.normal(kfb, (D,), jnp.float32) * 0.1
    bn1_gamma, bn1_beta = jnp.ones((D,)), jnp.zeros((D,))
    bn1_mean, bn1_var = jnp.zeros((D,)), jnp.ones((D,))
    bn1_scale = bn1_gamma / jnp.sqrt(bn1_var + eps)
    fc_w_t = (fc_w_raw * bn1_scale[:, None]).T                       # (C, D)
    fc_b = ((fc_b_raw - bn1_mean) * bn1_scale + bn1_beta).reshape(1, D)

    x_merge, x_left = mask_branch_forward(x, conv_w, conv_b, fc_w_t, fc_b, H, W)
    jax.block_until_ready((x_merge, x_left))

    ref_merge, ref_left = _reference(x, conv_w, conv_b, fc_w_t, fc_b)

    # Feature path: all-f32 accumulation -> tight tolerance.
    np.testing.assert_allclose(np.asarray(x_merge), np.asarray(ref_merge),
                               rtol=1e-4, atol=1e-4)
    # Mask is stored in the input dtype (bf16 here) per the perf review; the
    # in-kernel math uses the f32 mask, so only output quantization differs.
    x_left_f32 = np.asarray(x_left.astype(jnp.float32))
    np.testing.assert_allclose(x_left_f32, np.asarray(ref_left),
                               rtol=2e-2, atol=4e-3)

    assert x_merge.shape == (B, D) and x_left.shape == (B, 1, H, W)
    print("KERNEL_OK")
</pallas_src>

<mosaic_0001>
module attributes {stable_mosaic.version = 11 : i64} {
  func.func @_mask_branch_kernel(%arg0: i32, %arg1: i32, %arg2: memref<8x16x128xbf16, #tpu.memory_space<vmem>>, %arg3: memref<16x1xf32, #tpu.memory_space<vmem>>, %arg4: memref<1x1xf32, #tpu.memory_space<smem>>, %arg5: memref<16x32xf32, #tpu.memory_space<vmem>>, %arg6: memref<1x32xf32, #tpu.memory_space<vmem>>, %arg7: memref<8x128xbf16, #tpu.memory_space<vmem>>, %arg8: memref<8x32xf32, #tpu.memory_space<vmem>>, %arg9: memref<8x16xf32, #tpu.memory_space<vmem>>) attributes {dimension_semantics = [#tpu.dimension_semantics<parallel>, #tpu.dimension_semantics<arbitrary>], iteration_bounds = array<i64: 2, 1>, scalar_prefetch = 0 : i64, scratch_operands = 1 : i64, tpu.core_type = #tpu.core_type<tc>, window_params = [{transform_indices = @transform_0, window_bounds = array<i64: 8, 16, 128>}, {pipeline_mode = #tpu.pipeline_mode<synchronous>, transform_indices = @transform_1, window_bounds = array<i64: 16, 1>}, {transform_indices = @transform_2, window_bounds = array<i64: 1, 1>}, {pipeline_mode = #tpu.pipeline_mode<synchronous>, transform_indices = @transform_3, window_bounds = array<i64: 16, 32>}, {pipeline_mode = #tpu.pipeline_mode<synchronous>, transform_indices = @transform_4, window_bounds = array<i64: 1, 32>}, {transform_indices = @transform_5, window_bounds = array<i64: 8, 128>}, {transform_indices = @transform_6, window_bounds = array<i64: 8, 32>}]} {
    %c0_i32 = arith.constant 0 : i32
    %0 = arith.cmpi eq, %arg1, %c0_i32 : i32
    %1 = arith.extui %0 : i1 to i32
    %c0_i32_0 = arith.constant 0 : i32
    %2 = arith.cmpi ne, %1, %c0_i32_0 : i32
    scf.if %2 {
      %cst_21 = arith.constant 0.000000e+00 : f32
      %34 = vector.broadcast %cst_21 : f32 to vector<8x16xf32>
      %c0_22 = arith.constant 0 : index
      %c0_23 = arith.constant 0 : index
      %35 = vector.load %arg9[%c0_22, %c0_23] : memref<8x16xf32, #tpu.memory_space<vmem>>, vector<8x16xf32>
      tpu.vector_store %arg9[%c0_22, %c0_23], %34 {strides = array<i32>} : memref<8x16xf32, #tpu.memory_space<vmem>>, vector<8x16xf32>,
    } else {
    }
    %cst = arith.constant 0.000000e+00 : f32
    %3 = vector.broadcast %cst : f32 to vector<8x128xf32>
    %c0 = arith.constant 0 : index
    %c0_1 = arith.constant 0 : index
    %c0_2 = arith.constant 0 : index
    %4 = vector.load %arg2[%c0, %c0_1, %c0_2] : memref<8x16x128xbf16, #tpu.memory_space<vmem>>, vector<8x16x128xbf16>
    %5 = arith.extf %4 : vector<8x16x128xbf16> to vector<8x16x128xf32>
    %c0_3 = arith.constant 0 : index
    %c0_4 = arith.constant 0 : index
    %6 = vector.load %arg3[%c0_3, %c0_4] : memref<16x1xf32, #tpu.memory_space<vmem>>, vector<16x1xf32>
    %7 = vector.shape_cast %6 : vector<16x1xf32> to vector<1x16x1xf32>
    %8 = vector.broadcast %7 : vector<1x16x1xf32> to vector<8x16x128xf32>
    %9 = arith.mulf %5, %8 : vector<8x16x128xf32>
    %cst_5 = arith.constant dense<0.000000e+00> : vector<8x128xf32>
    %10 = vector.multi_reduction <add>, %9, %cst_5 [1] : vector<8x16x128xf32> to vector<8x128xf32>
    %11 = arith.addf %3, %10 : vector<8x128xf32>
    %c0_6 = arith.constant 0 : index
    %c0_7 = arith.constant 0 : index
    %12 = memref.load %arg4[%c0_6, %c0_7] : memref<1x1xf32, #tpu.memory_space<smem>>
    %13 = vector.broadcast %12 : f32 to vector<8x128xf32>
    %14 = arith.addf %11, %13 : vector<8x128xf32>
    %15 = arith.negf %14 : vector<8x128xf32>
    %16 = math.exp %15 : vector<8x128xf32>
    %cst_8 = arith.constant 1.000000e+00 : f32
    %17 = vector.broadcast %cst_8 : f32 to vector<8x128xf32>
    %18 = arith.addf %17, %16 : vector<8x128xf32>
    %19 = arith.divf %17, %18 : vector<8x128xf32>
    %20 = arith.truncf %19 : vector<8x128xf32> to vector<8x128xbf16>
    %c0_9 = arith.constant 0 : index
    %c0_10 = arith.constant 0 : index
    %21 = vector.load %arg7[%c0_9, %c0_10] : memref<8x128xbf16, #tpu.memory_space<vmem>>, vector<8x128xbf16>
    tpu.vector_store %arg7[%c0_9, %c0_10], %20 {strides = array<i32>} : memref<8x128xbf16, #tpu.memory_space<vmem>>, vector<8x128xbf16>,
    %c0_11 = arith.constant 0 : index
    %c0_12 = arith.constant 0 : index
    %c0_13 = arith.constant 0 : index
    %22 = vector.load %arg2[%c0_11, %c0_12, %c0_13] : memref<8x16x128xbf16, #tpu.memory_space<vmem>>, vector<8x16x128xbf16>
    %23 = arith.extf %22 : vector<8x16x128xbf16> to vector<8x16x128xf32>
    %c0_14 = arith.constant 0 : index
    %c0_15 = arith.constant 0 : index
    %24 = vector.load %arg9[%c0_14, %c0_15] : memref<8x16xf32, #tpu.memory_space<vmem>>, vector<8x16xf32>
    %25 = vector.shape_cast %19 : vector<8x128xf32> to vector<8x1x128xf32>
    %26 = vector.broadcast %25 : vector<8x1x128xf32> to vector<8x16x128xf32>
    %27 = arith.mulf %23, %26 : vector<8x16x128xf32>
    %cst_16 = arith.constant dense<0.000000e+00> : vector<8x16xf32>
    %28 = vector.multi_reduction <add>, %27, %cst_16 [2] : vector<8x16x128xf32> to vector<8x16xf32>
    %29 = arith.addf %24, %28 : vector<8x16xf32>
    %c0_17 = arith.constant 0 : index
    %c0_18 = arith.constant 0 : index
    %30 = vector.load %arg9[%c0_17, %c0_18] : memref<8x16xf32, #tpu.memory_space<vmem>>, vector<8x16xf32>
    tpu.vector_store %arg9[%c0_17, %c0_18], %29 {strides = array<i32>} : memref<8x16xf32, #tpu.memory_space<vmem>>, vector<8x16xf32>,
    %c0_i32_19 = arith.constant 0 : i32
    %31 = arith.cmpi eq, %arg1, %c0_i32_19 : i32
    %32 = arith.extui %31 : i1 to i32
    %c0_i32_20 = arith.constant 0 : i32
    %33 = arith.cmpi ne, %32, %c0_i32_20 : i32
    scf.if %33 {
      %c0_21 = arith.constant 0 : index
      %c0_22 = arith.constant 0 : index
      %34 = vector.load %arg9[%c0_21, %c0_22] : memref<8x16xf32, #tpu.memory_space<vmem>>, vector<8x16xf32>
      %c0_23 = arith.constant 0 : index
      %c0_24 = arith.constant 0 : index
      %35 = vector.load %arg5[%c0_23, %c0_24] : memref<16x32xf32, #tpu.memory_space<vmem>>, vector<16x32xf32>
      %cst_25 = arith.constant dense<0.000000e+00> : vector<8x32xf32>
      %36 = tpu.matmul %34, %35, %cst_25 {dimension_numbers = #tpu.dot_dimension_numbers<[1], [0], [0], [1], [0, 0, 1, 1], [], []>} : vector<8x16xf32>, vector<16x32xf32>, vector<8x32xf32> -> vector<8x32xf32>
      %c0_26 = arith.constant 0 : index
      %c0_27 = arith.constant 0 : index
      %37 = vector.load %arg6[%c0_26, %c0_27] : memref<1x32xf32, #tpu.memory_space<vmem>>, vector<1x32xf32>
      %38 = vector.broadcast %37 : vector<1x32xf32> to vector<8x32xf32>
      %39 = arith.addf %36, %38 : vector<8x32xf32>
      %c0_28 = arith.constant 0 : index
      %c0_29 = arith.constant 0 : index
      %40 = vector.load %arg8[%c0_28, %c0_29] : memref<8x32xf32, #tpu.memory_space<vmem>>, vector<8x32xf32>
      tpu.vector_store %arg8[%c0_28, %c0_29], %39 {strides = array<i32>} : memref<8x32xf32, #tpu.memory_space<vmem>>, vector<8x32xf32>,
    } else {
    }
    return
  }
  func.func @transform_0(%arg0: i32, %arg1: i32) -> (i32, i32, i32) {
    %c0_i32 = arith.constant 0 : i32
    %c0_i32_0 = arith.constant 0 : i32
    return %arg0, %c0_i32, %arg1 : i32, i32, i32
  }
  func.func @transform_1(%arg0: i32, %arg1: i32) -> (i32, i32) {
    %c0_i32 = arith.constant 0 : i32
    %c0_i32_0 = arith.constant 0 : i32
    %c0_i32_1 = arith.constant 0 : i32
    return %c0_i32, %c0_i32_0 : i32, i32
  }
  func.func @transform_2(%arg0: i32, %arg1: i32) -> (i32, i32) {
    %c0_i32 = arith.constant 0 : i32
    %c0_i32_0 = arith.constant 0 : i32
    %c0_i32_1 = arith.constant 0 : i32
    return %c0_i32, %c0_i32_0 : i32, i32
  }
  func.func @transform_3(%arg0: i32, %arg1: i32) -> (i32, i32) {
    %c0_i32 = arith.constant 0 : i32
    %c0_i32_0 = arith.constant 0 : i32
    %c0_i32_1 = arith.constant 0 : i32
    return %c0_i32, %c0_i32_0 : i32, i32
  }
  func.func @transform_4(%arg0: i32, %arg1: i32) -> (i32, i32) {
    %c0_i32 = arith.constant 0 : i32
    %c0_i32_0 = arith.constant 0 : i32
    %c0_i32_1 = arith.constant 0 : i32
    return %c0_i32, %c0_i32_0 : i32, i32
  }
  func.func @transform_5(%arg0: i32, %arg1: i32) -> (i32, i32) {
    %c0_i32 = arith.constant 0 : i32
    return %arg0, %arg1 : i32, i32
  }
  func.func @transform_6(%arg0: i32, %arg1: i32) -> (i32, i32) {
    %c0_i32 = arith.constant 0 : i32
    %c0_i32_0 = arith.constant 0 : i32
    return %arg0, %c0_i32 : i32, i32
  }
}

</mosaic_0001>

<llo_original>
// kernel: tpu_custom_call.1
$region0: #{tpu_custom_call.1}
  #allocation0 [shape = 'u32[]', space=smem, size = 0x4, offset = 0x4, fixed_abs, tag = 'smem constant byte address 0x4 - core index']
  #allocation1 [shape = 'u32[144,128]{1,0:T(1,128)}', space=vmem, size = 0x12000, scoped, tag = 'internal scratch']
  #allocation2 [shape = 'f32[8,16]{1,0:T(8,128)}', space=vmem, size = 0x1000, scoped, tag = 'scratch operand']
  #allocation3 [shape = 'f32[1,1]{1,0:T(1,128)S(6)}', space=smem, size = 0x200, scoped, tag = 'scoped memory for tpu_custom_call.1']
  %s0 = inlined_call_operand.hbm [shape: bf16[16,16,128], index: 0, kind: input, shape index: {}]
  %s1 = inlined_call_operand.vmem [shape: f32[16,1], index: 1, kind: input, shape index: {}]
  %s2 = inlined_call_operand.<no memory space> [shape: f32[1,1], index: 2, kind: input, shape index: {}]
  %s3 = inlined_call_operand.vmem [shape: f32[16,32], index: 3, kind: input, shape index: {}]
  %s4 = inlined_call_operand.vmem [shape: f32[1,32], index: 4, kind: input, shape index: {}]
  %s5 = inlined_call_operand.hbm [shape: bf16[16,128], index: 5, kind: output, shape index: {0}]
  %s6 = inlined_call_operand.hbm [shape: f32[16,32], index: 6, kind: output, shape index: {1}]
  %7 = xla_tuple %s5, %s6
  %s8 = sld [smem:[#allocation0]]
  $region73: #{tpu_custom_call.1} parent=0
    _
  %s10 = ssub.s32 1, %s8
  %s11 = scalar_select 0, %s10, %s8
  %12 = sst [smem:[#allocation3]] %s2
  $region1: #{tpu_custom_call.1} parent=0
    #allocation4 [shape = 'u8[65536]{0}', space=vmem, size = 0x10000, scoped, tag = 'input window, operand 0']
    #allocation5 [shape = 's32[2]{0}', space=sflag, size = 0x8, scoped, tag = 'scoped memory for tpu_custom_call.1']
    #allocation6 [shape = 's32[2]{0}', space=sflag, size = 0x8, scoped, tag = 'scoped memory for tpu_custom_call.1']
    #allocation7 [shape = 'u8[4096]{0}', space=vmem, size = 0x1000, scoped, tag = 'output window, operand 0']
    #allocation8 [shape = 'u8[8192]{0}', space=vmem, size = 0x2000, scoped, tag = 'output window, operand 1']
    #allocation9 [shape = 's32[2]{0}', space=sflag, size = 0x8, scoped, tag = 'scoped memory for tpu_custom_call.1']
    %13 = vsyncpa [#allocation5], 0
    %s14 = scalar_lea.sflag [#allocation5], 1
    %15 = vsyncpa %s14, 0
    %16 = vsyncpa [#allocation6], 0
    %s17 = scalar_lea.sflag [#allocation6], 1
    %18 = vsyncpa %s17, 0
    %19 = vsyncpa [#allocation9], 0
    %s20 = scalar_lea.sflag [#allocation9], 1
    %21 = vsyncpa %s20, 0
    loop: start=0, step=1, limit=4
    $region2: #{tpu_custom_call.1} parent=1 // loop_pre_header
      _
    $region3: #{tpu_custom_call.1} parent=1 // loop_header
      %s23 = sphi 0, %s27
      %p24 = scmp.ge.s32.totalorder %s23, 4
      %s30 = sphi 0, %s42
      %s31 = sphi 0, %s38
      %s32 = sphi 0, %s30
      %s33 = sphi 0, %s31
      %s34 = sphi 0, %s32
      %s35 = sphi 0, %s33
      %s47 = sphi 0, %s49
      %s50 = sphi 0, %s47
      %s51 = sphi 0, %s50
      %s67 = sphi 0, %s51
      %s71 = sphi 0, %s71
      %s73 = sphi 0, %s71
      %s74 = sphi 0, %s73
      %s88 = sphi 0, %s74
      %s92 = sphi 0, %s92
      %s94 = sphi 0, %s92
      %s95 = sphi 0, %s94
      %s109 = sphi 0, %s95
      %s113 = sphi 0, %s113
      %s115 = sphi 0, %s113
      %s116 = sphi 0, %s115
      %s130 = sphi 0, %s116
      %s134 = sphi 0, %s134
      %s136 = sphi 0, %s134
      %s137 = sphi 0, %s136
      %s151 = sphi 0, %s137
      %s159 = sphi 0, %s161
      %s162 = sphi 0, %s159
      %s163 = sphi 0, %s162
      %s179 = sphi 0, %s163
      %s185 = sphi 0, %s187
      %s188 = sphi 0, %s185
      %s189 = sphi 0, %s188
      %s205 = sphi 0, %s189
    $region4: #{tpu_custom_call.1} parent=1 // loop_header_branch
      %26 = sbr.rel (%p24) target = $region8
    $region5: #{tpu_custom_call.1} parent=1 // loop_body
      %s28 = ssub.s32 %s23, 1
      %s29 = ssub.s32 %s23, 2
      %s36 = sadd.s32 1, %s31
      %p37 = scmp.ge.s32.totalorder %s36, 1
      %s38 = scalar_select %p37, 0, %s36
      %s39 = sadd.s32 1, %s30
      %s40 = scalar_select %p37, %s39, %s30
      %p41 = scmp.ge.s32.totalorder %s40, 2
      %s42 = scalar_select %p41, 0, %s40
      %s43 = ssub.s32 %s30, %s42
      %s44 = ssub.s32 %s31, %s38
      %s45 = sor.u32 %s43, %s44
      %p46 = scmp.eq.s32.totalorder %s45, 0
      %s48 = sadd.s32 %s47, 1
      %s49 = scalar_select %p46, %s47, %s48
      %p52 = pneg %p46
      %p53 = scmp.eq.s32.totalorder %s23, 1
      %p54 = por %p52, %p53
      %p55 = scmp.ne.s32.totalorder %s47, %s50
      %p56 = scmp.eq.s32.totalorder %s23, 0
      %p57 = por %p55, %p56
      %p58 = scmp.ne.s32.totalorder %s47, %s50
      %p59 = scmp.eq.s32.totalorder %s28, 1
      %p60 = por %p58, %p59
      %p61 = scmp.ne.s32.totalorder %s50, %s51
      %p62 = scmp.eq.s32.totalorder %s28, 0
      %p63 = por %p61, %p62
      %p64 = scmp.ne.s32.totalorder %s50, %s51
      %p65 = scmp.eq.s32.totalorder %s29, 1
      %p66 = por %p64, %p65
      %p68 = scmp.ne.s32.totalorder %s51, %s67
      %p69 = scmp.eq.s32.totalorder %s29, 0
      %p70 = por %p68, %p69
      %s72 = sadd.s32 %s71, 1
      %p75 = scmp.eq.s32.totalorder %s23, 1
      %p76 = scmp.ne.s32.totalorder %s71, %s73
      %p77 = scmp.eq.s32.totalorder %s23, 0
      %p78 = por %p76, %p77
      %p79 = scmp.ne.s32.totalorder %s71, %s73
      %p80 = scmp.eq.s32.totalorder %s28, 1
      %p81 = por %p79, %p80
      %p82 = scmp.ne.s32.totalorder %s73, %s74
      %p83 = scmp.eq.s32.totalorder %s28, 0
      %p84 = por %p82, %p83
      %p85 = scmp.ne.s32.totalorder %s73, %s74
      %p86 = scmp.eq.s32.totalorder %s29, 1
      %p87 = por %p85, %p86
      %p89 = scmp.ne.s32.totalorder %s74, %s88
      %p90 = scmp.eq.s32.totalorder %s29, 0
      %p91 = por %p89, %p90
      %s93 = sadd.s32 %s92, 1
      %p96 = scmp.eq.s32.totalorder %s23, 1
      %p97 = scmp.ne.s32.totalorder %s92, %s94
      %p98 = scmp.eq.s32.totalorder %s23, 0
      %p99 = por %p97, %p98
      %p100 = scmp.ne.s32.totalorder %s92, %s94
      %p101 = scmp.eq.s32.totalorder %s28, 1
      %p102 = por %p100, %p101
      %p103 = scmp.ne.s32.totalorder %s94, %s95
      %p104 = scmp.eq.s32.totalorder %s28, 0
      %p105 = por %p103, %p104
      %p106 = scmp.ne.s32.totalorder %s94, %s95
      %p107 = scmp.eq.s32.totalorder %s29, 1
      %p108 = por %p106, %p107
      %p110 = scmp.ne.s32.totalorder %s95, %s109
      %p111 = scmp.eq.s32.totalorder %s29, 0
      %p112 = por %p110, %p111
      %s114 = sadd.s32 %s113, 1
      %p117 = scmp.eq.s32.totalorder %s23, 1
      %p118 = scmp.ne.s32.totalorder %s113, %s115
      %p119 = scmp.eq.s32.totalorder %s23, 0
      %p120 = por %p118, %p119
      %p121 = scmp.ne.s32.totalorder %s113, %s115
      %p122 = scmp.eq.s32.totalorder %s28, 1
      %p123 = por %p121, %p122
      %p124 = scmp.ne.s32.totalorder %s115, %s116
      %p125 = scmp.eq.s32.totalorder %s28, 0
      %p126 = por %p124, %p125
      %p127 = scmp.ne.s32.totalorder %s115, %s116
      %p128 = scmp.eq.s32.totalorder %s29, 1
      %p129 = por %p127, %p128
      %p131 = scmp.ne.s32.totalorder %s116, %s130
      %p132 = scmp.eq.s32.totalorder %s29, 0
      %p133 = por %p131, %p132
      %s135 = sadd.s32 %s134, 1
      %p138 = scmp.eq.s32.totalorder %s23, 1
      %p139 = scmp.ne.s32.totalorder %s134, %s136
      %p140 = scmp.eq.s32.totalorder %s23, 0
      %p141 = por %p139, %p140
      %p142 = scmp.ne.s32.totalorder %s134, %s136
      %p143 = scmp.eq.s32.totalorder %s28, 1
      %p144 = por %p142, %p143
      %p145 = scmp.ne.s32.totalorder %s136, %s137
      %p146 = scmp.eq.s32.totalorder %s28, 0
      %p147 = por %p145, %p146
      %p148 = scmp.ne.s32.totalorder %s136, %s137
      %p149 = scmp.eq.s32.totalorder %s29, 1
      %p150 = por %p148, %p149
      %p152 = scmp.ne.s32.totalorder %s137, %s151
      %p153 = scmp.eq.s32.totalorder %s29, 0
      %p154 = por %p152, %p153
      %s155 = ssub.s32 %s30, %s42
      %s156 = ssub.s32 %s31, %s38
      %s157 = sor.u32 %s155, %s156
      %p158 = scmp.eq.s32.totalorder %s157, 0
      %s160 = sadd.s32 %s159, 1
      %s161 = scalar_select %p158, %s159, %s160
      %p164 = pneg %p158
      %p165 = scmp.eq.s32.totalorder %s23, 1
      %p166 = por %p164, %p165
      %p167 = scmp.ne.s32.totalorder %s159, %s162
      %p168 = scmp.eq.s32.totalorder %s23, 0
      %p169 = por %p167, %p168
      %p170 = scmp.ne.s32.totalorder %s159, %s162
      %p171 = scmp.eq.s32.totalorder %s28, 1
      %p172 = por %p170, %p171
      %p173 = scmp.ne.s32.totalorder %s162, %s163
      %p174 = scmp.eq.s32.totalorder %s28, 0
      %p175 = por %p173, %p174
      %p176 = scmp.ne.s32.totalorder %s162, %s163
      %p177 = scmp.eq.s32.totalorder %s29, 1
      %p178 = por %p176, %p177
      %p180 = scmp.ne.s32.totalorder %s163, %s179
      %p181 = scmp.eq.s32.totalorder %s29, 0
      %p182 = por %p180, %p181
      %s183 = ssub.s32 %s30, %s42
      %p184 = scmp.eq.s32.totalorder %s183, 0
      %s186 = sadd.s32 %s185, 1
      %s187 = scalar_select %p184, %s185, %s186
      %p190 = pneg %p184
      %p191 = scmp.eq.s32.totalorder %s23, 1
      %p192 = por %p190, %p191
      %p193 = scmp.ne.s32.totalorder %s185, %s188
      %p194 = scmp.eq.s32.totalorder %s23, 0
      %p195 = por %p193, %p194
      %p196 = scmp.ne.s32.totalorder %s185, %s188
      %p197 = scmp.eq.s32.totalorder %s28, 1
      %p198 = por %p196, %p197
      %p199 = scmp.ne.s32.totalorder %s188, %s189
      %p200 = scmp.eq.s32.totalorder %s28, 0
      %p201 = por %p199, %p200
      %p202 = scmp.ne.s32.totalorder %s188, %s189
      %p203 = scmp.eq.s32.totalorder %s29, 1
      %p204 = por %p202, %p203
      %p206 = scmp.ne.s32.totalorder %s189, %s205
      %p207 = scmp.eq.s32.totalorder %s29, 0
      %p208 = por %p206, %p207
      %p209 = scmp.le.s32.totalorder 1, %s23
      %p210 = scmp.lt.s32.totalorder %s23, 3
      %p211 = pnand %p209, %p210
      %p212 = pneg %p211
      // Predicated region
      $region9: #{tpu_custom_call.1} parent=5 // pred_check
        _
      $region10: #{tpu_custom_call.1} parent=5 // pred_check_branch
        %214 = sbr.rel (%p211) target = $region12
      $region11: #{tpu_custom_call.1} parent=5 // pred_region
        %s215 = ssub.s32 %s23, 1
        // Predicated region
        $region13: #{tpu_custom_call.1} parent=11 // pred_check
          %p216 = pneg %p84
        $region14: #{tpu_custom_call.1} parent=11 // pred_check_branch
          %218 = sbr.rel (%p216) target = $region16
        $region15: #{tpu_custom_call.1} parent=11 // pred_region
          _
        $region16: #{tpu_custom_call.1} parent=11 // pred_fallthru
          _
        // Predicated region
        $region17: #{tpu_custom_call.1} parent=11 // pred_check
          %p219 = pneg %p105
        $region18: #{tpu_custom_call.1} parent=11 // pred_check_branch
          %221 = sbr.rel (%p219) target = $region20
        $region19: #{tpu_custom_call.1} parent=11 // pred_region
          _
        $region20: #{tpu_custom_call.1} parent=11 // pred_fallthru
          _
        // Predicated region
        $region21: #{tpu_custom_call.1} parent=11 // pred_check
          %p222 = pneg %p126
        $region22: #{tpu_custom_call.1} parent=11 // pred_check_branch
          %224 = sbr.rel (%p222) target = $region24
        $region23: #{tpu_custom_call.1} parent=11 // pred_region
          _
        $region24: #{tpu_custom_call.1} parent=11 // pred_fallthru
          _
        // Predicated region
        $region25: #{tpu_custom_call.1} parent=11 // pred_check
          %p225 = pneg %p147
        $region26: #{tpu_custom_call.1} parent=11 // pred_check_branch
          %227 = sbr.rel (%p225) target = $region28
        $region27: #{tpu_custom_call.1} parent=11 // pred_region
          _
        $region28: #{tpu_custom_call.1} parent=11 // pred_fallthru
          _
      $region12: #{tpu_custom_call.1} parent=5 // pred_fallthru
        _
      %p228 = scmp.lt.s32.totalorder %s23, 2
      // Predicated region
      $region29: #{tpu_custom_call.1} parent=5 // pred_check
        %p229 = pneg %p228
      $region30: #{tpu_custom_call.1} parent=5 // pred_check_branch
        %231 = sbr.rel (%p229) target = $region32
      $region31: #{tpu_custom_call.1} parent=5 // pred_region
        // Predicated region
        $region33: #{tpu_custom_call.1} parent=31 // pred_check
          %p232 = pneg %p57
        $region34: #{tpu_custom_call.1} parent=31 // pred_check_branch
          %234 = sbr.rel (%p232) target = $region36
        $region35: #{tpu_custom_call.1} parent=31 // pred_region
          %s235 = sand.u32 %s47, 1
          %s236 = scalar_lea.sflag [#allocation5], %s235
          %s237 = sand.u32 %s47, 1
          %s238 = smul.addr %s237, 64
          %s239 = scalar_lea.vmem [#allocation4], %s238
          %s240 = smul.u32 8, %s30
          %s242 = ssub.s32 1024, 1024
          %243 = vsyncadd %s236, %s242
          %s244 = smul.addr %s240, 2
          %s245 = sadd.s32 %s31, %s244
          %s246 = smul.addr %s245, 64
          %s247 = scalar_lea.hbm %s0, %s246
          %s248 = sshll.u32 %s239, 4
          %s249 = int_to_ptr.vmem [resolvable:$true] %s248
          %254 = dma.hbm_to_vmem [thread:$0]  %s247, 1024, %s249, %s236, 64, 64, 4
        $region36: #{tpu_custom_call.1} parent=31 // pred_fallthru
          _
      $region32: #{tpu_custom_call.1} parent=5 // pred_fallthru
        _
      %p255 = scmp.le.s32.totalorder 1, %s23
      %p256 = scmp.lt.s32.totalorder %s23, 3
      %p257 = pnand %p255, %p256
      %p258 = pneg %p257
      // Predicated region
      $region37: #{tpu_custom_call.1} parent=5 // pred_check
        _
      $region38: #{tpu_custom_call.1} parent=5 // pred_check_branch
        %260 = sbr.rel (%p257) target = $region40
      $region39: #{tpu_custom_call.1} parent=5 // pred_region
        %s261 = ssub.s32 %s23, 1
        %s262 = sand.u32 %s50, 1
        %s263 = scalar_lea.sflag [#allocation5], %s262
        %s264 = sand.u32 %s50, 1
        %s265 = smul.addr %s264, 64
        %s266 = scalar_lea.vmem [#allocation4], %s265
        // Predicated region
        $region41: #{tpu_custom_call.1} parent=39 // pred_check
          %p267 = pneg %p63
        $region42: #{tpu_custom_call.1} parent=39 // pred_check_branch
          %269 = sbr.rel (%p267) target = $region44
        $region43: #{tpu_custom_call.1} parent=39 // pred_region
          %270 = dma.done %s263, 1024
        $region44: #{tpu_custom_call.1} parent=39 // pred_fallthru
          _
        %s271 = sand.u32 %s50, 1
        %s272 = scalar_lea.sflag [#allocation5], %s271
        %s273 = sand.u32 %s50, 1
        %s274 = smul.addr %s273, 64
        %s275 = scalar_lea.vmem [#allocation4], %s274
        %p276 = pneg %p63
        %p277 = pneg %p60
        %p278 = pneg %p84
        %p279 = pneg %p81
        %p280 = pneg %p105
        %p281 = pneg %p102
        %p282 = pneg %p126
        %p283 = pneg %p123
        %p284 = pneg %p147
        %p285 = pneg %p144
        %p286 = pneg %p175
        %p287 = pneg %p172
        %s288 = sand.u32 %s162, 1
        %s289 = scalar_lea.sflag [#allocation6], %s288
        %s290 = sand.u32 %s162, 1
        %s291 = smul.addr %s290, 4
        %s292 = scalar_lea.vmem [#allocation7], %s291
        %p293 = pneg %p201
        %p294 = pneg %p198
        %s295 = sand.u32 %s188, 1
        %s296 = scalar_lea.sflag [#allocation9], %s295
        %s297 = sand.u32 %s188, 1
        %s298 = smul.addr %s297, 8
        %s299 = scalar_lea.vmem [#allocation8], %s298
        %s300 = smul.u32 8, %s32
        %p301 = scmp.eq.s32.totalorder %s33, 0
        // Predicated region
        $region45: #{tpu_custom_call.1} parent=39 // pred_check
          %p302 = pneg %p301
        $region46: #{tpu_custom_call.1} parent=39 // pred_check_branch
          %304 = sbr.rel (%p302) target = $region48
        $region47: #{tpu_custom_call.1} parent=39 // pred_region
          %vm305 = vcmask 130048
          %306 = vst.msk [vmem:[#allocation2] sm:$0xff] %vm305, 0.0
        $region48: #{tpu_custom_call.1} parent=39 // pred_fallthru
          _
        %v307 = vld [vmem:[%s266] sm:$0xf]
        %v308 = vld [vmem:[%s266 + $0x4] sm:$0xf]
        %v309 = vld [vmem:[%s266 + $0x8] sm:$0xf]
        %v310 = vld [vmem:[%s266 + $0xc] sm:$0xf]
        %v311 = vld [vmem:[%s266 + $0x10] sm:$0xf]
        %v312 = vld [vmem:[%s266 + $0x14] sm:$0xf]
        %v313 = vld [vmem:[%s266 + $0x18] sm:$0xf]
        %v314 = vld [vmem:[%s266 + $0x1c] sm:$0xf]
        %v315 = vld [vmem:[%s266 + $0x20] sm:$0xf]
        %v316 = vld [vmem:[%s266 + $0x24] sm:$0xf]
        %v317 = vld [vmem:[%s266 + $0x28] sm:$0xf]
        %v318 = vld [vmem:[%s266 + $0x2c] sm:$0xf]
        %v319 = vld [vmem:[%s266 + $0x30] sm:$0xf]
        %v320 = vld [vmem:[%s266 + $0x34] sm:$0xf]
        %v321 = vld [vmem:[%s266 + $0x38] sm:$0xf]
        %v322 = vld [vmem:[%s266 + $0x3c] sm:$0xf]
        %v323 = vunpack.c.l.bf16 %v307
        %v324 = vunpack.c.l.bf16 %v308
        %v325 = vunpack.c.l.bf16 %v309
        %v326 = vunpack.c.l.bf16 %v310
        %v327 = vunpack.c.l.bf16 %v311
        %v328 = vunpack.c.l.bf16 %v312
        %v329 = vunpack.c.l.bf16 %v313
        %v330 = vunpack.c.l.bf16 %v314
        %v331 = vunpack.c.l.bf16 %v315
        %v332 = vunpack.c.l.bf16 %v316
        %v333 = vunpack.c.l.bf16 %v317
        %v334 = vunpack.c.l.bf16 %v318
        %v335 = vunpack.c.l.bf16 %v319
        %v336 = vunpack.c.l.bf16 %v320
        %v337 = vunpack.c.l.bf16 %v321
        %v338 = vunpack.c.l.bf16 %v322
        %v339 = vld [vmem:[%s1] sm:$0xff]
        %v340 = vld [vmem:[%s1 + $0x8] sm:$0xff]
        %342 = vset.pattern.permute.xlu0 0
        %343 = vperm.xlu0 %342, %v339
        %v344 = vpop.permute.xlu0 %343
        %347 = vset.pattern.permute.xlu0 0
        %348 = vperm.xlu0 %347, %v340
        %v349 = vpop.permute.xlu0 %348
        %v351 = vmul.f32 %v323, %v344
        %v352 = vmul.f32 %v324, %v349
        %v353 = vmul.f32 %v325, %v344
        %v354 = vmul.f32 %v326, %v349
        %v355 = vmul.f32 %v327, %v344
        %v356 = vmul.f32 %v328, %v349
        %v357 = vmul.f32 %v329, %v344
        %v358 = vmul.f32 %v330, %v349
        %v359 = vmul.f32 %v331, %v344
        %v360 = vmul.f32 %v332, %v349
        %v361 = vmul.f32 %v333, %v344
        %v362 = vmul.f32 %v334, %v349
        %v363 = vmul.f32 %v335, %v344
        %v364 = vmul.f32 %v336, %v349
        %v365 = vmul.f32 %v337, %v344
        %v366 = vmul.f32 %v338, %v349
        %v367 = vadd.f32 %v351, %v352
        %v368 = vrot.slane %v367, 4
        %v369 = vadd.f32 %v367, %v368
        %v370 = vrot.slane %v369, 2
        %v371 = vadd.f32 %v369, %v370
        %v372 = vrot.slane %v371, 1
        %v373 = vadd.f32 %v371, %v372
        %v374 = vadd.f32 %v353, %v354
        %v375 = vrot.slane %v374, 4
        %v376 = vadd.f32 %v374, %v375
        %v377 = vrot.slane %v376, 2
        %v378 = vadd.f32 %v376, %v377
        %v379 = vrot.slane %v378, 1
        %v380 = vadd.f32 %v378, %v379
        %v381 = vadd.f32 %v355, %v356
        %v382 = vrot.slane %v381, 4
        %v383 = vadd.f32 %v381, %v382
        %v384 = vrot.slane %v383, 2
        %v385 = vadd.f32 %v383, %v384
        %v386 = vrot.slane %v385, 1
        %v387 = vadd.f32 %v385, %v386
        %v388 = vadd.f32 %v357, %v358
        %v389 = vrot.slane %v388, 4
        %v390 = vadd.f32 %v388, %v389
        %v391 = vrot.slane %v390, 2
        %v392 = vadd.f32 %v390, %v391
        %v393 = vrot.slane %v392, 1
        %v394 = vadd.f32 %v392, %v393
        %v395 = vadd.f32 %v359, %v360
        %v396 = vrot.slane %v395, 4
        %v397 = vadd.f32 %v395, %v396
        %v398 = vrot.slane %v397, 2
        %v399 = vadd.f32 %v397, %v398
        %v400 = vrot.slane %v399, 1
        %v401 = vadd.f32 %v399, %v400
        %v402 = vadd.f32 %v361, %v362
        %v403 = vrot.slane %v402, 4
        %v404 = vadd.f32 %v402, %v403
        %v405 = vrot.slane %v404, 2
        %v406 = vadd.f32 %v404, %v405
        %v407 = vrot.slane %v406, 1
        %v408 = vadd.f32 %v406, %v407
        %v409 = vadd.f32 %v363, %v364
        %v410 = vrot.slane %v409, 4
        %v411 = vadd.f32 %v409, %v410
        %v412 = vrot.slane %v411, 2
        %v413 = vadd.f32 %v411, %v412
        %v414 = vrot.slane %v413, 1
        %v415 = vadd.f32 %v413, %v414
        %v416 = vadd.f32 %v365, %v366
        %v417 = vrot.slane %v416, 4
        %v418 = vadd.f32 %v416, %v417
        %v419 = vrot.slane %v418, 2
        %v420 = vadd.f32 %v418, %v419
        %v421 = vrot.slane %v420, 1
        %v422 = vadd.f32 %v420, %v421
        %v423 = vadd.f32 %v373, 0.0
        %v424 = vadd.f32 %v380, 0.0
        %v425 = vadd.f32 %v387, 0.0
        %v426 = vadd.f32 %v394, 0.0
        %v427 = vadd.f32 %v401, 0.0
        %v428 = vadd.f32 %v408, 0.0
        %v429 = vadd.f32 %v415, 0.0
        %v430 = vadd.f32 %v422, 0.0
        %s431 = sld [smem:[#allocation3]]
        %v432 = vstv %s431
        %v433 = vadd.f32 %v423, %v432
        %v434 = vadd.f32 %v424, %v432
        %v435 = vadd.f32 %v425, %v432
        %v436 = vadd.f32 %v426, %v432
        %v437 = vadd.f32 %v427, %v432
        %v438 = vadd.f32 %v428, %v432
        %v439 = vadd.f32 %v429, %v432
        %v440 = vadd.f32 %v430, %v432
        %v441 = vxor.u32 %v433, 2147483648
        %v442 = vxor.u32 %v434, 2147483648
        %v443 = vxor.u32 %v435, 2147483648
        %v444 = vxor.u32 %v436, 2147483648
        %v445 = vxor.u32 %v437, 2147483648
        %v446 = vxor.u32 %v438, 2147483648
        %v447 = vxor.u32 %v439, 2147483648
        %v448 = vxor.u32 %v440, 2147483648
        %v449 = vmul.f32 %v441, 1.442695
        %v450 = vpow.pop %v449
        %v451 = vmul.f32 %v442, 1.442695
        %v452 = vpow.pop %v451
        %v453 = vmul.f32 %v443, 1.442695
        %v454 = vpow.pop %v453
        %v455 = vmul.f32 %v444, 1.442695
        %v456 = vpow.pop %v455
        %v457 = vmul.f32 %v445, 1.442695
        %v458 = vpow.pop %v457
        %v459 = vmul.f32 %v446, 1.442695
        %v460 = vpow.pop %v459
        %v461 = vmul.f32 %v447, 1.442695
        %v462 = vpow.pop %v461
        %v463 = vmul.f32 %v448, 1.442695
        %v464 = vpow.pop %v463
        %v465 = vadd.f32 %v450, 1.0
        %v466 = vadd.f32 %v452, 1.0
        %v467 = vadd.f32 %v454, 1.0
        %v468 = vadd.f32 %v456, 1.0
        %v469 = vadd.f32 %v458, 1.0
        %v470 = vadd.f32 %v460, 1.0
        %v471 = vadd.f32 %v462, 1.0
        %v472 = vadd.f32 %v464, 1.0
        %v473 = vrcp.pop %v465
        %v474 = vmul.f32 1.0, %v473
        %v475 = vrcp.pop %v466
        %v476 = vmul.f32 1.0, %v475
        %v477 = vrcp.pop %v467
        %v478 = vmul.f32 1.0, %v477
        %v479 = vrcp.pop %v468
        %v480 = vmul.f32 1.0, %v479
        %v481 = vrcp.pop %v469
        %v482 = vmul.f32 1.0, %v481
        %v483 = vrcp.pop %v470
        %v484 = vmul.f32 1.0, %v483
        %v485 = vrcp.pop %v471
        %v486 = vmul.f32 1.0, %v485
        %v487 = vrcp.pop %v472
        %v488 = vmul.f32 1.0, %v487
        %v489 = vpack.c.bf16 %v474, %v474
        %v490 = vpack.c.bf16 %v476, %v476
        %v491 = vpack.c.bf16 %v478, %v478
        %v492 = vpack.c.bf16 %v480, %v480
        %v493 = vpack.c.bf16 %v482, %v482
        %v494 = vpack.c.bf16 %v484, %v484
        %v495 = vpack.c.bf16 %v486, %v486
        %v496 = vpack.c.bf16 %v488, %v488
        %v505 = vunpack.c.l.b16 %v489
        %v506 = vunpack.c.l.b16 %v490
        %v507 = vunpack.c.l.b16 %v491
        %v508 = vunpack.c.l.b16 %v492
        %v509 = vunpack.c.l.b16 %v493
        %v510 = vunpack.c.l.b16 %v494
        %v511 = vunpack.c.l.b16 %v495
        %v512 = vunpack.c.l.b16 %v496
        %v513 = vpack.c.b16 %v505, %v505
        %v514 = vpack.c.b16 %v506, %v506
        %v515 = vpack.c.b16 %v507, %v507
        %v516 = vpack.c.b16 %v508, %v508
        %v517 = vpack.c.b16 %v509, %v509
        %v518 = vpack.c.b16 %v510, %v510
        %v519 = vpack.c.b16 %v511, %v511
        %v520 = vpack.c.b16 %v512, %v512
        %v521 = vunpack.c.l.b16 %v513
        %v522 = vunpack.c.l.b16 %v514
        %v523 = vunpack.c.l.b16 %v515
        %v524 = vunpack.c.l.b16 %v516
        %v525 = vunpack.c.l.b16 %v517
        %v526 = vunpack.c.l.b16 %v518
        %v527 = vunpack.c.l.b16 %v519
        %v528 = vunpack.c.l.b16 %v520
        %vm529 = vcmask 1041409
        %v530 = vsel %vm529, %v522, %v521
        %vm531 = vcmask 1042434
        %v532 = vsel %vm531, %v523, %v530
        %vm533 = vcmask 1043459
        %v534 = vsel %vm533, %v524, %v532
        %vm535 = vcmask 1044484
        %v536 = vsel %vm535, %v525, %v534
        %vm537 = vcmask 1045509
        %v538 = vsel %vm537, %v526, %v536
        %vm539 = vcmask 1046534
        %v540 = vsel %vm539, %v527, %v538
        %vm541 = vcmask 1047559
        %v542 = vsel %vm541, %v528, %v540
        %v543 = vpack.c.b16 %v542, %v542
        %545 = vst [vmem:[%s292] sm:$0xf] %v543
        %v546 = vld [vmem:[%s266] sm:$0xf]
        %v547 = vld [vmem:[%s266 + $0x4] sm:$0xf]
        %v548 = vld [vmem:[%s266 + $0x8] sm:$0xf]
        %v549 = vld [vmem:[%s266 + $0xc] sm:$0xf]
        %v550 = vld [vmem:[%s266 + $0x10] sm:$0xf]
        %v551 = vld [vmem:[%s266 + $0x14] sm:$0xf]
        %v552 = vld [vmem:[%s266 + $0x18] sm:$0xf]
        %v553 = vld [vmem:[%s266 + $0x1c] sm:$0xf]
        %v554 = vld [vmem:[%s266 + $0x20] sm:$0xf]
        %v555 = vld [vmem:[%s266 + $0x24] sm:$0xf]
        %v556 = vld [vmem:[%s266 + $0x28] sm:$0xf]
        %v557 = vld [vmem:[%s266 + $0x2c] sm:$0xf]
        %v558 = vld [vmem:[%s266 + $0x30] sm:$0xf]
        %v559 = vld [vmem:[%s266 + $0x34] sm:$0xf]
        %v560 = vld [vmem:[%s266 + $0x38] sm:$0xf]
        %v561 = vld [vmem:[%s266 + $0x3c] sm:$0xf]
        %v562 = vunpack.c.l.bf16 %v546
        %v563 = vunpack.c.l.bf16 %v547
        %v564 = vunpack.c.l.bf16 %v548
        %v565 = vunpack.c.l.bf16 %v549
        %v566 = vunpack.c.l.bf16 %v550
        %v567 = vunpack.c.l.bf16 %v551
        %v568 = vunpack.c.l.bf16 %v552
        %v569 = vunpack.c.l.bf16 %v553
        %v570 = vunpack.c.l.bf16 %v554
        %v571 = vunpack.c.l.bf16 %v555
        %v572 = vunpack.c.l.bf16 %v556
        %v573 = vunpack.c.l.bf16 %v557
        %v574 = vunpack.c.l.bf16 %v558
        %v575 = vunpack.c.l.bf16 %v559
        %v576 = vunpack.c.l.bf16 %v560
        %v577 = vunpack.c.l.bf16 %v561
        %v578 = vld [vmem:[#allocation2] sm:$0xff]
        %v579 = vmul.f32 %v562, %v474
        %v580 = vmul.f32 %v563, %v474
        %v581 = vmul.f32 %v564, %v476
        %v582 = vmul.f32 %v565, %v476
        %v583 = vmul.f32 %v566, %v478
        %v584 = vmul.f32 %v567, %v478
        %v585 = vmul.f32 %v568, %v480
        %v586 = vmul.f32 %v569, %v480
        %v587 = vmul.f32 %v570, %v482
        %v588 = vmul.f32 %v571, %v482
        %v589 = vmul.f32 %v572, %v484
        %v590 = vmul.f32 %v573, %v484
        %v591 = vmul.f32 %v574, %v486
        %v592 = vmul.f32 %v575, %v486
        %v593 = vmul.f32 %v576, %v488
        %v594 = vmul.f32 %v577, %v488
        %595 = vadd.xlane.f32.xlu0 %v579
        %v596 = vpop.xlane.xlu0 %595
        %597 = vadd.xlane.f32.xlu0 %v580
        %v598 = vpop.xlane.xlu0 %597
        %599 = vadd.xlane.f32.xlu0 %v581
        %v600 = vpop.xlane.xlu0 %599
        %601 = vadd.xlane.f32.xlu0 %v582
        %v602 = vpop.xlane.xlu0 %601
        %603 = vadd.xlane.f32.xlu0 %v583
        %v604 = vpop.xlane.xlu0 %603
        %605 = vadd.xlane.f32.xlu0 %v584
        %v606 = vpop.xlane.xlu0 %605
        %607 = vadd.xlane.f32.xlu0 %v585
        %v608 = vpop.xlane.xlu0 %607
        %609 = vadd.xlane.f32.xlu0 %v586
        %v610 = vpop.xlane.xlu0 %609
        %611 = vadd.xlane.f32.xlu0 %v587
        %v612 = vpop.xlane.xlu0 %611
        %613 = vadd.xlane.f32.xlu0 %v588
        %v614 = vpop.xlane.xlu0 %613
        %615 = vadd.xlane.f32.xlu0 %v589
        %v616 = vpop.xlane.xlu0 %615
        %617 = vadd.xlane.f32.xlu0 %v590
        %v618 = vpop.xlane.xlu0 %617
        %619 = vadd.xlane.f32.xlu0 %v591
        %v620 = vpop.xlane.xlu0 %619
        %621 = vadd.xlane.f32.xlu0 %v592
        %v622 = vpop.xlane.xlu0 %621
        %623 = vadd.xlane.f32.xlu0 %v593
        %v624 = vpop.xlane.xlu0 %623
        %625 = vadd.xlane.f32.xlu0 %v594
        %v626 = vpop.xlane.xlu0 %625
        %v643 = vlaneseq
        %v644 = vand.u32 %v643, 127
        %v645 = vlaneseq
        %v646 = vshrl.u32 %v645, 7
        %v647 = vsub.s32 %v644, %v646
        %v648 = vrot.slane %v596, %v647
        %v649 = vadd.s32 %v644, 4294967288
        %v650 = vlaneseq
        %v651 = vshrl.u32 %v650, 7
        %v652 = vsub.s32 %v649, %v651
        %v653 = vrot.slane %v598, %v652
        %vm654 = vcmask 130112
        %v655 = vsel %vm654, %v653, %v648
        %v656 = vlaneseq
        %v657 = vshrl.u32 %v656, 7
        %v658 = vsub.s32 %v644, %v657
        %v659 = vrot.slane %v600, %v658
        %v660 = vlaneseq
        %v661 = vshrl.u32 %v660, 7
        %v662 = vsub.s32 %v649, %v661
        %v663 = vrot.slane %v602, %v662
        %v664 = vsel %vm654, %v663, %v659
        %v665 = vlaneseq
        %v666 = vshrl.u32 %v665, 7
        %v667 = vsub.s32 %v644, %v666
        %v668 = vrot.slane %v604, %v667
        %v669 = vlaneseq
        %v670 = vshrl.u32 %v669, 7
        %v671 = vsub.s32 %v649, %v670
        %v672 = vrot.slane %v606, %v671
        %v673 = vsel %vm654, %v672, %v668
        %v674 = vlaneseq
        %v675 = vshrl.u32 %v674, 7
        %v676 = vsub.s32 %v644, %v675
        %v677 = vrot.slane %v608, %v676
        %v678 = vlaneseq
        %v679 = vshrl.u32 %v678, 7
        %v680 = vsub.s32 %v649, %v679
        %v681 = vrot.slane %v610, %v680
        %v682 = vsel %vm654, %v681, %v677
        %v683 = vlaneseq
        %v684 = vshrl.u32 %v683, 7
        %v685 = vsub.s32 %v644, %v684
        %v686 = vrot.slane %v612, %v685
        %v687 = vlaneseq
        %v688 = vshrl.u32 %v687, 7
        %v689 = vsub.s32 %v649, %v688
        %v690 = vrot.slane %v614, %v689
        %v691 = vsel %vm654, %v690, %v686
        %v692 = vlaneseq
        %v693 = vshrl.u32 %v692, 7
        %v694 = vsub.s32 %v644, %v693
        %v695 = vrot.slane %v616, %v694
        %v696 = vlaneseq
        %v697 = vshrl.u32 %v696, 7
        %v698 = vsub.s32 %v649, %v697
        %v699 = vrot.slane %v618, %v698
        %v700 = vsel %vm654, %v699, %v695
        %v701 = vlaneseq
        %v702 = vshrl.u32 %v701, 7
        %v703 = vsub.s32 %v644, %v702
        %v704 = vrot.slane %v620, %v703
        %v705 = vlaneseq
        %v706 = vshrl.u32 %v705, 7
        %v707 = vsub.s32 %v649, %v706
        %v708 = vrot.slane %v622, %v707
        %v709 = vsel %vm654, %v708, %v704
        %v710 = vlaneseq
        %v711 = vshrl.u32 %v710, 7
        %v712 = vsub.s32 %v644, %v711
        %v713 = vrot.slane %v624, %v712
        %v714 = vlaneseq
        %v715 = vshrl.u32 %v714, 7
        %v716 = vsub.s32 %v649, %v715
        %v717 = vrot.slane %v626, %v716
        %v718 = vsel %vm654, %v717, %v713
        %v719 = vsel %vm529, %v664, %v655
        %v720 = vsel %vm531, %v673, %v719
        %v721 = vsel %vm533, %v682, %v720
        %v722 = vsel %vm535, %v691, %v721
        %v723 = vsel %vm537, %v700, %v722
        %v724 = vsel %vm539, %v709, %v723
        %v725 = vsel %vm541, %v718, %v724
        %v727 = vadd.f32 %v578, %v725
        %vm728 = vcmask 130048
        %729 = vst.msk [vmem:[#allocation2] sm:$0xff] %vm728, %v727
        // Predicated region
        $region49: #{tpu_custom_call.1} parent=39 // pred_check
          %p730 = pneg %p301
        $region50: #{tpu_custom_call.1} parent=39 // pred_check_branch
          %732 = sbr.rel (%p730) target = $region52
        $region51: #{tpu_custom_call.1} parent=39 // pred_region
          %v733 = vld [vmem:[#allocation2] sm:$0xff]
          %v734 = vld [vmem:[%s3] sm:$0xff]
          %v735 = vld [vmem:[%s3 + $0x8] sm:$0xff]
          %v736 = vld [vmem:[%s4] sm:$0x1]
          %v738 = vlaneseq
          %v739 = vshrl.u32 %v738, 7
          %v740 = vsub.s32 0, %v739
          %v741 = vrot.slane %v736, %v740
          %v744 = vsel %vm728, %v733, 0
          %746 = vmatprep.subr.mxu0 0.0
          %747 = vmatpush1.msra.mxu0 %v734
          %748 = vmatprep.subr.mxu0 0.0
          %749 = vmatpush1.msra.mxu0 %v735
          %750 = vmatprep.subr.mxu0 0.0
          %751 = vmatpush1.msra.mxu0 0.0
          %752 = vmatprep.subr.mxu0 0.0
          %753 = vmatpush1.msra.mxu0 0.0
          %754 = vmatprep.subr.mxu0 0.0
          %755 = vmatpush1.msra.mxu0 0.0
          %756 = vmatprep.subr.mxu0 0.0
          %757 = vmatpush1.msra.mxu0 0.0
          %758 = vmatprep.subr.mxu0 0.0
          %759 = vmatpush1.msra.mxu0 0.0
          %760 = vmatprep.subr.mxu0 0.0
          %761 = vmatpush1.msra.mxu0 0.0
          %762 = vmatprep.subr.mxu0 0.0
          %763 = vmatpush1.msra.mxu0 0.0
          %764 = vmatprep.subr.mxu0 0.0
          %765 = vmatpush1.msra.mxu0 0.0
          %766 = vmatprep.subr.mxu0 0.0
          %767 = vmatpush1.msra.mxu0 0.0
          %768 = vmatprep.subr.mxu0 0.0
          %769 = vmatpush1.msra.mxu0 0.0
          %770 = vmatprep.subr.mxu0 0.0
          %771 = vmatpush1.msra.mxu0 0.0
          %772 = vmatprep.subr.mxu0 0.0
          %773 = vmatpush1.msra.mxu0 0.0
          %774 = vmatprep.subr.mxu0 0.0
          %775 = vmatpush1.msra.mxu0 0.0
          %776 = vmatprep.subr.mxu0 0.0
          %777 = vmatpush1.msra.mxu0 0.0
          %778 = vmatprep.subr.mxu0 0.0
          %779 = vmatpush1.msra.mxu0 0.0
          %780 = vmatprep.subr.mxu0 0.0
          %781 = vmatpush1.msra.mxu0 0.0
          %782 = vmatprep.subr.mxu0 0.0
          %783 = vmatpush1.msra.mxu0 0.0
          %784 = vmatprep.subr.mxu0 0.0
          %785 = vmatpush1.msra.mxu0 0.0
          %786 = vmatprep.subr.mxu0 0.0
          %787 = vmatpush1.msra.mxu0 0.0
          %788 = vmatprep.subr.mxu0 0.0
          %789 = vmatpush1.msra.mxu0 0.0
          %790 = vmatprep.subr.mxu0 0.0
          %791 = vmatpush1.msra.mxu0 0.0
          %792 = vmatprep.subr.mxu0 0.0
          %793 = vmatpush1.msra.mxu0 0.0
          %794 = vmatprep.subr.mxu0 0.0
          %795 = vmatpush1.msra.mxu0 0.0
          %796 = vmatprep.subr.mxu0 0.0
          %797 = vmatpush1.msra.mxu0 0.0
          %798 = vmatprep.subr.mxu0 0.0
          %799 = vmatpush1.msra.mxu0 0.0
          %800 = vmatprep.subr.mxu0 0.0
          %801 = vmatpush1.msra.mxu0 0.0
          %802 = vmatprep.subr.mxu0 0.0
          %803 = vmatpush1.msra.mxu0 0.0
          %804 = vmatprep.subr.mxu0 0.0
          %805 = vmatpush1.msra.mxu0 0.0
          %806 = vmatprep.subr.mxu0 0.0
          %807 = vmatpush1.msra.mxu0 0.0
          %808 = vmatprep.subr.mxu0 0.0
          %809 = vmatpush1.msra.mxu0 0.0
          %810 = vmatprep.mubr.f32.mxu0 0.0
          %811 = vmatmul.mubr.f32.gmra.mrb[0].mxu0 %v744
          %v812 = vpop.f32.mrb[0].mxu0
          %v813 = vadd.f32 %v741, %v812
          %v814 = vpop.f32.mrb[0].mxu0
          %815 = vdwg.mxu0
          %vm816 = vcmask 261120
          %817 = vst.msk [vmem:[%s299] sm:$0xff] %vm816, %v813
        $region52: #{tpu_custom_call.1} parent=39 // pred_fallthru
          _
        %s818 = sand.u32 %s162, 1
        %s819 = scalar_lea.sflag [#allocation6], %s818
        %s820 = sand.u32 %s162, 1
        %s821 = smul.addr %s820, 4
        %s822 = scalar_lea.vmem [#allocation7], %s821
        %s823 = sand.u32 %s188, 1
        %s824 = scalar_lea.sflag [#allocation9], %s823
        %s825 = sand.u32 %s188, 1
        %s826 = smul.addr %s825, 8
        %s827 = scalar_lea.vmem [#allocation8], %s826
        // Predicated region
        $region53: #{tpu_custom_call.1} parent=39 // pred_check
          %p828 = pneg %p172
        $region54: #{tpu_custom_call.1} parent=39 // pred_check_branch
          %830 = sbr.rel (%p828) target = $region56
        $region55: #{tpu_custom_call.1} parent=39 // pred_region
          %s832 = ssub.s32 64, 64
          %833 = vsyncadd %s819, %s832
          %s834 = sadd.s32 %s33, %s32
          %s835 = smul.addr %s834, 64
          %s836 = scalar_lea.hbm %s5, %s835
          %s838 = sshll.u32 %s822, 4
          %s839 = int_to_ptr.vmem [resolvable:$true] %s838
          %841 = dma.vmem_to_hbm [thread:$0]  %s839, 64, %s836, %s819
        $region56: #{tpu_custom_call.1} parent=39 // pred_fallthru
          _
        // Predicated region
        $region57: #{tpu_custom_call.1} parent=39 // pred_check
          %p842 = pneg %p198
        $region58: #{tpu_custom_call.1} parent=39 // pred_check_branch
          %844 = sbr.rel (%p842) target = $region60
        $region59: #{tpu_custom_call.1} parent=39 // pred_region
          %s846 = ssub.s32 128, 128
          %847 = vsyncadd %s824, %s846
          %s848 = smul.addr %s32, 128
          %s849 = scalar_lea.hbm %s6, %s848
          %s851 = sshll.u32 %s827, 4
          %s852 = int_to_ptr.vmem [resolvable:$true] %s851
          %854 = dma.vmem_to_hbm [thread:$0]  %s852, 128, %s849, %s824
        $region60: #{tpu_custom_call.1} parent=39 // pred_fallthru
          _
      $region40: #{tpu_custom_call.1} parent=5 // pred_fallthru
        _
      %p855 = scmp.le.s32.totalorder 2, %s23
      // Predicated region
      $region61: #{tpu_custom_call.1} parent=5 // pred_check
        %p856 = pneg %p855
      $region62: #{tpu_custom_call.1} parent=5 // pred_check_branch
        %858 = sbr.rel (%p856) target = $region64
      $region63: #{tpu_custom_call.1} parent=5 // pred_region
        %s859 = ssub.s32 %s23, 2
        // Predicated region
        $region65: #{tpu_custom_call.1} parent=63 // pred_check
          %p860 = pneg %p178
        $region66: #{tpu_custom_call.1} parent=63 // pred_check_branch
          %862 = sbr.rel (%p860) target = $region68
        $region67: #{tpu_custom_call.1} parent=63 // pred_region
          %s863 = sand.u32 %s163, 1
          %s864 = scalar_lea.sflag [#allocation6], %s863
          %s865 = sand.u32 %s163, 1
          %s866 = smul.addr %s865, 4
          %s867 = scalar_lea.vmem [#allocation7], %s866
          %868 = dma.done %s864, 64
        $region68: #{tpu_custom_call.1} parent=63 // pred_fallthru
          _
        // Predicated region
        $region69: #{tpu_custom_call.1} parent=63 // pred_check
          %p869 = pneg %p204
        $region70: #{tpu_custom_call.1} parent=63 // pred_check_branch
          %871 = sbr.rel (%p869) target = $region72
        $region71: #{tpu_custom_call.1} parent=63 // pred_region
          %s872 = sand.u32 %s189, 1
          %s873 = scalar_lea.sflag [#allocation9], %s872
          %s874 = sand.u32 %s189, 1
          %s875 = smul.addr %s874, 8
          %s876 = scalar_lea.vmem [#allocation8], %s875
          %877 = dma.done %s873, 128
        $region72: #{tpu_custom_call.1} parent=63 // pred_fallthru
          _
      $region64: #{tpu_custom_call.1} parent=5 // pred_fallthru
        _
    $region6: #{tpu_custom_call.1} parent=1 // loop_footer
      %s27 = sadd.s32 1, %s23
    $region7: #{tpu_custom_call.1} parent=1 // loop_footer_branch
      %22 = sbr.rel target = $region3
    $region8: #{tpu_custom_call.1} parent=1 // loop_exit
      _
    %878 = vsyncpa [#allocation5], 1
    %s879 = scalar_lea.sflag [#allocation5], 1
    %880 = vsyncpa %s879, 1
    %881 = vsyncpa [#allocation6], 1
    %s882 = scalar_lea.sflag [#allocation6], 1
    %883 = vsyncpa %s882, 1
    %884 = vsyncpa [#allocation9], 1
    %s885 = scalar_lea.sflag [#allocation9], 1
    %886 = vsyncpa %s885, 1

</llo_original>
